<compile_context>
chip_gen: v6e
topology: v6e:2x2x1
jax: 0.10.0
libtpu: 0.0.40
codegen_flags: <defaults>
</compile_context>

<pallas_src>
import functools

import jax
import jax.numpy as jnp
from jax.experimental import pallas as pl
from jax.experimental.pallas import tpu as pltpu


# ----------------------------------------------------------------------------
# Pallas kernel: one LSTM layer, both directions fused, full sequence in VMEM.
# grid = (1,); the time loop is an (unrolled) lax.fori_loop inside the kernel.
#
# Inputs:
#   gx_ref   : [T, B, nd*4H] f32   x @ W_ih + b, gate-interleaved columns
#                                  [i | f | g | o], each block = [fwd | bwd];
#                                  the bwd half is already time-reversed.
#   w_hh_ref : [nd*H, nd*4H] bf16  block-structured recurrent weights (same
#                                  column layout; fwd rows feed only fwd cols).
#   h0_ref   : [B, nd*H] f32       initial hidden  [fwd | bwd]
#   c0_ref   : [B, nd*H] f32       initial cell    [fwd | bwd]
# Output:
#   y_ref    : [T, B, nd*H] f32    per-time-step [h_fwd | h_bwd]
# ----------------------------------------------------------------------------
def _lstm_seq_kernel(gx_ref, w_hh_ref, h0_ref, c0_ref, y_ref, *,
                     hid_dim, bidirectional, unroll):
    H = hid_dim
    nd = 2 if bidirectional else 1
    G = nd * H                              # width of one gate block
    T = gx_ref.shape[0]

    w_hh = w_hh_ref[...]                    # bf16, resident in VMEM/vregs
    h0 = h0_ref[...]
    c0 = c0_ref[...]

    def body(s, carry):
        h, c = carry                        # [B, nd*H] f32
        # One MXU matmul per step serves both directions (block-structured W).
        rec = jnp.dot(h.astype(w_hh.dtype), w_hh,
                      preferred_element_type=jnp.float32)        # [B, nd*4H]
        gates = gx_ref[s] + rec
        # Single cell evaluation for both directions (gate-interleaved layout).
        i_g = jax.nn.sigmoid(gates[:, 0 * G:1 * G])
        f_g = jax.nn.sigmoid(gates[:, 1 * G:2 * G])
        g_g = jnp.tanh(gates[:, 2 * G:3 * G])
        o_g = jax.nn.sigmoid(gates[:, 3 * G:4 * G])
        c_new = f_g * c + i_g * g_g
        h_new = o_g * jnp.tanh(c_new)       # [B, nd*H] = [h_fwd | h_bwd]
        if bidirectional:
            # forward output at time s, backward output at original time T-1-s
            y_ref[pl.ds(s, 1), :, 0:H] = h_new[None, :, 0:H]
            y_ref[pl.ds(T - 1 - s, 1), :, H:2 * H] = h_new[None, :, H:2 * H]
        else:
            y_ref[pl.ds(s, 1), :, :] = h_new[None]
        return h_new, c_new

    jax.lax.fori_loop(0, T, body, (h0, c0), unroll=unroll)


def lstm_layer_pallas(gx, w_hh, h0, c0, *, hid_dim, bidirectional):
    """One (bi)directional LSTM layer over the full sequence (time-major)."""
    T, B, Gx = gx.shape
    nd = 2 if bidirectional else 1
    H = hid_dim
    # Full unroll for short sequences gives the LLO scheduler visibility;
    # bounded unroll for long sequences to keep compile time sane.
    unroll = True if T <= 64 else 8
    # TODO(synk): for very long sequences the whole gx block may not fit VMEM;
    # a chunked time grid with carried h/c scratch would be needed there.
    kernel = functools.partial(_lstm_seq_kernel, hid_dim=H,
                               bidirectional=bidirectional, unroll=unroll)
    return pl.pallas_call(
        kernel,
        out_shape=jax.ShapeDtypeStruct((T, B, nd * H), jnp.float32),
        grid=(1,),
        in_specs=[
            pl.BlockSpec((T, B, Gx), lambda i: (0, 0, 0)),       # gates_x
            pl.BlockSpec(w_hh.shape, lambda i: (0, 0)),          # W_hh (bf16)
            pl.BlockSpec((B, nd * H), lambda i: (0, 0)),         # h0
            pl.BlockSpec((B, nd * H), lambda i: (0, 0)),         # c0
        ],
        out_specs=pl.BlockSpec((T, B, nd * H), lambda i: (0, 0, 0)),
        compiler_params=pltpu.CompilerParams(
            dimension_semantics=("arbitrary",)),  # sequential recurrence
    )(gx, w_hh, h0, c0)


# ----------------------------------------------------------------------------
# Parameter initialization (deterministic, synthetic).
# ----------------------------------------------------------------------------
def init_params(key, inp_dim, metadata_dim, hid_dim, num_layers, bidirectional):
    num_dir = 2 if bidirectional else 1
    H = hid_dim
    keys = iter(jax.random.split(key, 256))
    scale = 0.1

    def rnd(shape):
        return scale * jax.random.normal(next(keys), shape, dtype=jnp.float32)

    params = {
        # nn.Embedding(2, metadata_dim)
        "emb": rnd((2, metadata_dim)),
        # MetadataEncoder (gated MLP -> initial LSTM states)
        "gate_w": rnd((metadata_dim, metadata_dim)),
        "gate_b": rnd((metadata_dim,)),
        "enc1_w": rnd((metadata_dim, metadata_dim * 4)),
        "enc1_b": rnd((metadata_dim * 4,)),
        "enc_h_w": rnd((metadata_dim * 4, num_layers * num_dir * H)),
        "enc_h_b": rnd((num_layers * num_dir * H,)),
        "enc_c_w": rnd((metadata_dim * 4, num_layers * num_dir * H)),
        "enc_c_b": rnd((num_layers * num_dir * H,)),
        # reg head
        "reg_w": rnd((H * num_dir, 1)),
        "reg_b": rnd((1,)),
        "lstm": {},
    }

    for layer in range(num_layers):
        d_in = inp_dim if layer == 0 else H * num_dir
        if bidirectional:
            w_ih_f = rnd((d_in, 4 * H))
            w_ih_b = rnd((d_in, 4 * H))
            w_hh_f = rnd((H, 4 * H))
            w_hh_b = rnd((H, 4 * H))
            b_f = rnd((4 * H,))              # single bias (torch: b_ih + b_hh)
            b_b = rnd((4 * H,))
            # Gate-interleaved, block-structured recurrent weights:
            # for gate g and direction d, columns [g*2H + d*H : g*2H + (d+1)*H]
            # are fed only by rows [d*H : (d+1)*H].
            w_hh_int = jnp.zeros((2 * H, 8 * H), jnp.float32)
            for d, w in enumerate((w_hh_f, w_hh_b)):
                for g in range(4):
                    w_hh_int = w_hh_int.at[
                        d * H:(d + 1) * H,
                        g * 2 * H + d * H: g * 2 * H + (d + 1) * H].set(
                            w[:, g * H:(g + 1) * H])
            b_int = jnp.stack([b_f.reshape(4, H), b_b.reshape(4, H)],
                              axis=1).reshape(1, 1, 8 * H)
            params["lstm"][layer] = dict(
                w_ih_f=w_ih_f.astype(jnp.bfloat16),
                w_ih_b=w_ih_b.astype(jnp.bfloat16),
                w_hh=w_hh_int.astype(jnp.bfloat16),
                b=b_int)
        else:
            params["lstm"][layer] = dict(
                w_ih=rnd((d_in, 4 * H)).astype(jnp.bfloat16),
                w_hh=rnd((H, 4 * H)).astype(jnp.bfloat16),
                b=rnd((1, 1, 4 * H)))
    return params


# ----------------------------------------------------------------------------
# Full forward: mirrors LSTMBaseline.forward((x, metadata, label, _, _)).
# ----------------------------------------------------------------------------
def lstm_baseline_forward(params, x, metadata, label, *, hid_dim, num_layers,
                          bidirectional):
    num_dir = 2 if bidirectional else 1
    H = hid_dim
    B = x.shape[0]

    # directional bias embedding: idx = trunc((label[:,0] + 1) / 2)
    idx = (label[:, 0].astype(jnp.int32) + 1) // 2
    bias_vec = jnp.take(params["emb"], idx, axis=0)            # [B, metadata_dim]

    # metadata encoder -> initial hidden/cell states (small MLP, plain JAX glue)
    m = metadata + bias_vec
    gate = jax.nn.sigmoid(m @ params["gate_w"] + params["gate_b"])
    m = m * gate
    h_enc = jnp.tanh(m @ params["enc1_w"] + params["enc1_b"])
    init_h = jnp.tanh(h_enc @ params["enc_h_w"] + params["enc_h_b"])
    init_c = jnp.tanh(h_enc @ params["enc_c_w"] + params["enc_c_b"])
    init_h = init_h.reshape(B, num_layers * num_dir, H).transpose(1, 0, 2)
    init_c = init_c.reshape(B, num_layers * num_dir, H).transpose(1, 0, 2)

    # temporal enricher LSTM (Pallas hot path), time-major
    y = jnp.transpose(x, (1, 0, 2)).astype(jnp.float32)        # [T, B, D_in]
    for layer in range(num_layers):
        p = params["lstm"][layer]
        Tn, Bn, Dn = y.shape
        y2d = y.reshape(Tn * Bn, Dn).astype(jnp.bfloat16)
        if bidirectional:
            # Hoisted input projection: two big bf16 matmuls over the whole
            # sequence; bwd half time-reversed here; bias folded in; columns
            # interleaved per gate so the kernel's cell evaluates both
            # directions at once.
            gx_f = jnp.dot(y2d, p["w_ih_f"], preferred_element_type=jnp.float32
                           ).reshape(Tn, Bn, 4, H)
            gx_b = jnp.dot(y2d, p["w_ih_b"], preferred_element_type=jnp.float32
                           ).reshape(Tn, Bn, 4, H)[::-1]
            gx = jnp.stack([gx_f, gx_b], axis=3).reshape(Tn, Bn, 8 * H) + p["b"]
            h0 = jnp.concatenate(
                [init_h[2 * layer], init_h[2 * layer + 1]], axis=-1)
            c0 = jnp.concatenate(
                [init_c[2 * layer], init_c[2 * layer + 1]], axis=-1)
        else:
            gx = jnp.dot(y2d, p["w_ih"], preferred_element_type=jnp.float32
                         ).reshape(Tn, Bn, 4 * H) + p["b"]
            h0 = init_h[layer]
            c0 = init_c[layer]
        y = lstm_layer_pallas(gx, p["w_hh"], h0, c0, hid_dim=H,
                              bidirectional=bidirectional)     # [T, B, nd*H]
        # TODO(synk): inter-layer dropout omitted (eval-mode semantics).

    y = jnp.transpose(y, (1, 0, 2))                            # [B, T, nd*H]
    x1 = y[:, -1, :]
    x2 = y[:, 0, :]
    out = (x1 + x2) @ params["reg_w"] + params["reg_b"]        # [B, 1]
    out = out[:, 0]
    loss = jnp.mean((out - label[:, 1]) ** 2)                  # nn.MSELoss
    return out, loss


# ----------------------------------------------------------------------------
if __name__ == "__main__":
    # small shapes consistent with the module
    B, T = 2, 8
    inp_dim = 16
    metadata_dim = 8
    hid_dim = 32
    num_layers = 2
    bidirectional = True

    key = jax.random.PRNGKey(0)
    k_p, k_x, k_m, k_l0, k_l1 = jax.random.split(key, 5)

    params = init_params(k_p, inp_dim, metadata_dim, hid_dim, num_layers,
                         bidirectional)

    x = jax.random.normal(k_x, (B, T, inp_dim), dtype=jnp.float32)
    metadata = jax.random.normal(k_m, (B, metadata_dim), dtype=jnp.float32)
    # label[:,0] is a direction in {-1,+1}; label[:,1] is the regression target
    direction = jnp.where(
        jax.random.bernoulli(k_l0, 0.5, (B,)), 1.0, -1.0).astype(jnp.float32)
    target = jax.random.normal(k_l1, (B,), dtype=jnp.float32)
    label = jnp.stack([direction, target], axis=1)             # [B, 2]

    fwd = jax.jit(functools.partial(
        lstm_baseline_forward, hid_dim=hid_dim, num_layers=num_layers,
        bidirectional=bidirectional))

    out, loss = fwd(params, x, metadata, label)
    out = jax.block_until_ready(out)
    loss = jax.block_until_ready(loss)
    assert out.shape == (B,)
    assert loss.shape == ()
    print("KERNEL_OK")
</pallas_src>

<mosaic_0001>
module attributes {stable_mosaic.version = 11 : i64} {
  func.func @_lstm_seq_kernel(%arg0: i32, %arg1: memref<8x2x256xf32, #tpu.memory_space<vmem>>, %arg2: memref<64x256xbf16, #tpu.memory_space<vmem>>, %arg3: memref<2x64xf32, #tpu.memory_space<vmem>>, %arg4: memref<2x64xf32, #tpu.memory_space<vmem>>, %arg5: memref<8x2x64xf32, #tpu.memory_space<vmem>>) attributes {dimension_semantics = [#tpu.dimension_semantics<arbitrary>], iteration_bounds = array<i64: 1>, scalar_prefetch = 0 : i64, scratch_operands = 0 : i64, tpu.core_type = #tpu.core_type<tc>, window_params = [{pipeline_mode = #tpu.pipeline_mode<synchronous>, transform_indices = @transform_0, window_bounds = array<i64: 8, 2, 256>}, {pipeline_mode = #tpu.pipeline_mode<synchronous>, transform_indices = @transform_1, window_bounds = array<i64: 64, 256>}, {pipeline_mode = #tpu.pipeline_mode<synchronous>, transform_indices = @transform_2, window_bounds = array<i64: 2, 64>}, {pipeline_mode = #tpu.pipeline_mode<synchronous>, transform_indices = @transform_3, window_bounds = array<i64: 2, 64>}, {pipeline_mode = #tpu.pipeline_mode<synchronous>, transform_indices = @transform_4, window_bounds = array<i64: 8, 2, 64>}]} {
    %c0 = arith.constant 0 : index
    %c0_0 = arith.constant 0 : index
    %0 = vector.load %arg2[%c0, %c0_0] : memref<64x256xbf16, #tpu.memory_space<vmem>>, vector<64x256xbf16>
    %c0_1 = arith.constant 0 : index
    %c0_2 = arith.constant 0 : index
    %1 = vector.load %arg3[%c0_1, %c0_2] : memref<2x64xf32, #tpu.memory_space<vmem>>, vector<2x64xf32>
    %c0_3 = arith.constant 0 : index
    %c0_4 = arith.constant 0 : index
    %2 = vector.load %arg4[%c0_3, %c0_4] : memref<2x64xf32, #tpu.memory_space<vmem>>, vector<2x64xf32>
    %c0_i32 = arith.constant 0 : i32
    %3 = arith.truncf %1 : vector<2x64xf32> to vector<2x64xbf16>
    %cst = arith.constant dense<0.000000e+00> : vector<2x256xf32>
    %4 = tpu.matmul %3, %0, %cst {dimension_numbers = #tpu.dot_dimension_numbers<[1], [0], [0], [1], [0, 0, 1, 1], [], []>} : vector<2x64xbf16>, vector<64x256xbf16>, vector<2x256xf32> -> vector<2x256xf32>
    %5 = arith.index_cast %c0_i32 : i32 to index
    %c0_5 = arith.constant 0 : index
    %c0_6 = arith.constant 0 : index
    %6 = vector.load %arg1[%5, %c0_5, %c0_6] : memref<8x2x256xf32, #tpu.memory_space<vmem>>, vector<1x2x256xf32>
    %7 = vector.shape_cast %6 : vector<1x2x256xf32> to vector<2x256xf32>
    %8 = arith.addf %7, %4 : vector<2x256xf32>
    %9 = vector.extract_strided_slice %8 {offsets = [0, 0], sizes = [2, 64], strides = [1, 1]} : vector<2x256xf32> to vector<2x64xf32>
    %10 = arith.negf %9 : vector<2x64xf32>
    %11 = math.exp %10 : vector<2x64xf32>
    %cst_7 = arith.constant 1.000000e+00 : f32
    %12 = vector.broadcast %cst_7 : f32 to vector<2x64xf32>
    %13 = arith.addf %12, %11 : vector<2x64xf32>
    %14 = arith.divf %12, %13 : vector<2x64xf32>
    %15 = vector.extract_strided_slice %8 {offsets = [0, 64], sizes = [2, 64], strides = [1, 1]} : vector<2x256xf32> to vector<2x64xf32>
    %16 = arith.negf %15 : vector<2x64xf32>
    %17 = math.exp %16 : vector<2x64xf32>
    %cst_8 = arith.constant 1.000000e+00 : f32
    %18 = vector.broadcast %cst_8 : f32 to vector<2x64xf32>
    %19 = arith.addf %18, %17 : vector<2x64xf32>
    %20 = arith.divf %18, %19 : vector<2x64xf32>
    %21 = vector.extract_strided_slice %8 {offsets = [0, 128], sizes = [2, 64], strides = [1, 1]} : vector<2x256xf32> to vector<2x64xf32>
    %22 = math.tanh %21 : vector<2x64xf32>
    %23 = vector.extract_strided_slice %8 {offsets = [0, 192], sizes = [2, 64], strides = [1, 1]} : vector<2x256xf32> to vector<2x64xf32>
    %24 = arith.negf %23 : vector<2x64xf32>
    %25 = math.exp %24 : vector<2x64xf32>
    %cst_9 = arith.constant 1.000000e+00 : f32
    %26 = vector.broadcast %cst_9 : f32 to vector<2x64xf32>
    %27 = arith.addf %26, %25 : vector<2x64xf32>
    %28 = arith.divf %26, %27 : vector<2x64xf32>
    %29 = arith.mulf %20, %2 : vector<2x64xf32>
    %30 = arith.mulf %14, %22 : vector<2x64xf32>
    %31 = arith.addf %29, %30 : vector<2x64xf32>
    %32 = math.tanh %31 : vector<2x64xf32>
    %33 = arith.mulf %28, %32 : vector<2x64xf32>
    %34 = vector.extract_strided_slice %33 {offsets = [0, 0], sizes = [2, 32], strides = [1, 1]} : vector<2x64xf32> to vector<2x32xf32>
    %35 = vector.shape_cast %34 : vector<2x32xf32> to vector<1x2x32xf32>
    %36 = arith.index_cast %c0_i32 : i32 to index
    %c0_10 = arith.constant 0 : index
    %c0_11 = arith.constant 0 : index
    %37 = vector.load %arg5[%36, %c0_10, %c0_11] : memref<8x2x64xf32, #tpu.memory_space<vmem>>, vector<1x2x32xf32>
    tpu.vector_store %arg5[%36, %c0_10, %c0_11], %35 {strides = array<i32>} : memref<8x2x64xf32, #tpu.memory_space<vmem>>, vector<1x2x32xf32>,
    %38 = vector.extract_strided_slice %33 {offsets = [0, 32], sizes = [2, 32], strides = [1, 1]} : vector<2x64xf32> to vector<2x32xf32>
    %39 = vector.shape_cast %38 : vector<2x32xf32> to vector<1x2x32xf32>
    %c7_i32 = arith.constant 7 : i32
    %40 = arith.subi %c7_i32, %c0_i32 : i32
    %41 = arith.index_cast %40 : i32 to index
    %c0_12 = arith.constant 0 : index
    %c32 = arith.constant 32 : index
    %42 = vector.load %arg5[%41, %c0_12, %c32] : memref<8x2x64xf32, #tpu.memory_space<vmem>>, vector<1x2x32xf32>
    tpu.vector_store %arg5[%41, %c0_12, %c32], %39 {strides = array<i32>} : memref<8x2x64xf32, #tpu.memory_space<vmem>>, vector<1x2x32xf32>,
    %c1_i32 = arith.constant 1 : i32
    %43 = arith.truncf %33 : vector<2x64xf32> to vector<2x64xbf16>
    %cst_13 = arith.constant dense<0.000000e+00> : vector<2x256xf32>
    %44 = tpu.matmul %43, %0, %cst_13 {dimension_numbers = #tpu.dot_dimension_numbers<[1], [0], [0], [1], [0, 0, 1, 1], [], []>} : vector<2x64xbf16>, vector<64x256xbf16>, vector<2x256xf32> -> vector<2x256xf32>
    %45 = arith.index_cast %c1_i32 : i32 to index
    %c0_14 = arith.constant 0 : index
    %c0_15 = arith.constant 0 : index
    %46 = vector.load %arg1[%45, %c0_14, %c0_15] : memref<8x2x256xf32, #tpu.memory_space<vmem>>, vector<1x2x256xf32>
    %47 = vector.shape_cast %46 : vector<1x2x256xf32> to vector<2x256xf32>
    %48 = arith.addf %47, %44 : vector<2x256xf32>
    %49 = vector.extract_strided_slice %48 {offsets = [0, 0], sizes = [2, 64], strides = [1, 1]} : vector<2x256xf32> to vector<2x64xf32>
    %50 = arith.negf %49 : vector<2x64xf32>
    %51 = math.exp %50 : vector<2x64xf32>
    %cst_16 = arith.constant 1.000000e+00 : f32
    %52 = vector.broadcast %cst_16 : f32 to vector<2x64xf32>
    %53 = arith.addf %52, %51 : vector<2x64xf32>
    %54 = arith.divf %52, %53 : vector<2x64xf32>
    %55 = vector.extract_strided_slice %48 {offsets = [0, 64], sizes = [2, 64], strides = [1, 1]} : vector<2x256xf32> to vector<2x64xf32>
    %56 = arith.negf %55 : vector<2x64xf32>
    %57 = math.exp %56 : vector<2x64xf32>
    %cst_17 = arith.constant 1.000000e+00 : f32
    %58 = vector.broadcast %cst_17 : f32 to vector<2x64xf32>
    %59 = arith.addf %58, %57 : vector<2x64xf32>
    %60 = arith.divf %58, %59 : vector<2x64xf32>
    %61 = vector.extract_strided_slice %48 {offsets = [0, 128], sizes = [2, 64], strides = [1, 1]} : vector<2x256xf32> to vector<2x64xf32>
    %62 = math.tanh %61 : vector<2x64xf32>
    %63 = vector.extract_strided_slice %48 {offsets = [0, 192], sizes = [2, 64], strides = [1, 1]} : vector<2x256xf32> to vector<2x64xf32>
    %64 = arith.negf %63 : vector<2x64xf32>
    %65 = math.exp %64 : vector<2x64xf32>
    %cst_18 = arith.constant 1.000000e+00 : f32
    %66 = vector.broadcast %cst_18 : f32 to vector<2x64xf32>
    %67 = arith.addf %66, %65 : vector<2x64xf32>
    %68 = arith.divf %66, %67 : vector<2x64xf32>
    %69 = arith.mulf %60, %31 : vector<2x64xf32>
    %70 = arith.mulf %54, %62 : vector<2x64xf32>
    %71 = arith.addf %69, %70 : vector<2x64xf32>
    %72 = math.tanh %71 : vector<2x64xf32>
    %73 = arith.mulf %68, %72 : vector<2x64xf32>
    %74 = vector.extract_strided_slice %73 {offsets = [0, 0], sizes = [2, 32], strides = [1, 1]} : vector<2x64xf32> to vector<2x32xf32>
    %75 = vector.shape_cast %74 : vector<2x32xf32> to vector<1x2x32xf32>
    %76 = arith.index_cast %c1_i32 : i32 to index
    %c0_19 = arith.constant 0 : index
    %c0_20 = arith.constant 0 : index
    %77 = vector.load %arg5[%76, %c0_19, %c0_20] : memref<8x2x64xf32, #tpu.memory_space<vmem>>, vector<1x2x32xf32>
    tpu.vector_store %arg5[%76, %c0_19, %c0_20], %75 {strides = array<i32>} : memref<8x2x64xf32, #tpu.memory_space<vmem>>, vector<1x2x32xf32>,
    %78 = vector.extract_strided_slice %73 {offsets = [0, 32], sizes = [2, 32], strides = [1, 1]} : vector<2x64xf32> to vector<2x32xf32>
    %79 = vector.shape_cast %78 : vector<2x32xf32> to vector<1x2x32xf32>
    %c7_i32_21 = arith.constant 7 : i32
    %80 = arith.subi %c7_i32_21, %c1_i32 : i32
    %81 = arith.index_cast %80 : i32 to index
    %c0_22 = arith.constant 0 : index
    %c32_23 = arith.constant 32 : index
    %82 = vector.load %arg5[%81, %c0_22, %c32_23] : memref<8x2x64xf32, #tpu.memory_space<vmem>>, vector<1x2x32xf32>
    tpu.vector_store %arg5[%81, %c0_22, %c32_23], %79 {strides = array<i32>} : memref<8x2x64xf32, #tpu.memory_space<vmem>>, vector<1x2x32xf32>,
    %c2_i32 = arith.constant 2 : i32
    %83 = arith.truncf %73 : vector<2x64xf32> to vector<2x64xbf16>
    %cst_24 = arith.constant dense<0.000000e+00> : vector<2x256xf32>
    %84 = tpu.matmul %83, %0, %cst_24 {dimension_numbers = #tpu.dot_dimension_numbers<[1], [0], [0], [1], [0, 0, 1, 1], [], []>} : vector<2x64xbf16>, vector<64x256xbf16>, vector<2x256xf32> -> vector<2x256xf32>
    %85 = arith.index_cast %c2_i32 : i32 to index
    %c0_25 = arith.constant 0 : index
    %c0_26 = arith.constant 0 : index
    %86 = vector.load %arg1[%85, %c0_25, %c0_26] : memref<8x2x256xf32, #tpu.memory_space<vmem>>, vector<1x2x256xf32>
    %87 = vector.shape_cast %86 : vector<1x2x256xf32> to vector<2x256xf32>
    %88 = arith.addf %87, %84 : vector<2x256xf32>
    %89 = vector.extract_strided_slice %88 {offsets = [0, 0], sizes = [2, 64], strides = [1, 1]} : vector<2x256xf32> to vector<2x64xf32>
    %90 = arith.negf %89 : vector<2x64xf32>
    %91 = math.exp %90 : vector<2x64xf32>
    %cst_27 = arith.constant 1.000000e+00 : f32
    %92 = vector.broadcast %cst_27 : f32 to vector<2x64xf32>
    %93 = arith.addf %92, %91 : vector<2x64xf32>
    %94 = arith.divf %92, %93 : vector<2x64xf32>
    %95 = vector.extract_strided_slice %88 {offsets = [0, 64], sizes = [2, 64], strides = [1, 1]} : vector<2x256xf32> to vector<2x64xf32>
    %96 = arith.negf %95 : vector<2x64xf32>
    %97 = math.exp %96 : vector<2x64xf32>
    %cst_28 = arith.constant 1.000000e+00 : f32
    %98 = vector.broadcast %cst_28 : f32 to vector<2x64xf32>
    %99 = arith.addf %98, %97 : vector<2x64xf32>
    %100 = arith.divf %98, %99 : vector<2x64xf32>
    %101 = vector.extract_strided_slice %88 {offsets = [0, 128], sizes = [2, 64], strides = [1, 1]} : vector<2x256xf32> to vector<2x64xf32>
    %102 = math.tanh %101 : vector<2x64xf32>
    %103 = vector.extract_strided_slice %88 {offsets = [0, 192], sizes = [2, 64], strides = [1, 1]} : vector<2x256xf32> to vector<2x64xf32>
    %104 = arith.negf %103 : vector<2x64xf32>
    %105 = math.exp %104 : vector<2x64xf32>
    %cst_29 = arith.constant 1.000000e+00 : f32
    %106 = vector.broadcast %cst_29 : f32 to vector<2x64xf32>
    %107 = arith.addf %106, %105 : vector<2x64xf32>
    %108 = arith.divf %106, %107 : vector<2x64xf32>
    %109 = arith.mulf %100, %71 : vector<2x64xf32>
    %110 = arith.mulf %94, %102 : vector<2x64xf32>
    %111 = arith.addf %109, %110 : vector<2x64xf32>
    %112 = math.tanh %111 : vector<2x64xf32>
    %113 = arith.mulf %108, %112 : vector<2x64xf32>
    %114 = vector.extract_strided_slice %113 {offsets = [0, 0], sizes = [2, 32], strides = [1, 1]} : vector<2x64xf32> to vector<2x32xf32>
    %115 = vector.shape_cast %114 : vector<2x32xf32> to vector<1x2x32xf32>
    %116 = arith.index_cast %c2_i32 : i32 to index
    %c0_30 = arith.constant 0 : index
    %c0_31 = arith.constant 0 : index
    %117 = vector.load %arg5[%116, %c0_30, %c0_31] : memref<8x2x64xf32, #tpu.memory_space<vmem>>, vector<1x2x32xf32>
    tpu.vector_store %arg5[%116, %c0_30, %c0_31], %115 {strides = array<i32>} : memref<8x2x64xf32, #tpu.memory_space<vmem>>, vector<1x2x32xf32>,
    %118 = vector.extract_strided_slice %113 {offsets = [0, 32], sizes = [2, 32], strides = [1, 1]} : vector<2x64xf32> to vector<2x32xf32>
    %119 = vector.shape_cast %118 : vector<2x32xf32> to vector<1x2x32xf32>
    %c7_i32_32 = arith.constant 7 : i32
    %120 = arith.subi %c7_i32_32, %c2_i32 : i32
    %121 = arith.index_cast %120 : i32 to index
    %c0_33 = arith.constant 0 : index
    %c32_34 = arith.constant 32 : index
    %122 = vector.load %arg5[%121, %c0_33, %c32_34] : memref<8x2x64xf32, #tpu.memory_space<vmem>>, vector<1x2x32xf32>
    tpu.vector_store %arg5[%121, %c0_33, %c32_34], %119 {strides = array<i32>} : memref<8x2x64xf32, #tpu.memory_space<vmem>>, vector<1x2x32xf32>,
    %c3_i32 = arith.constant 3 : i32
    %123 = arith.truncf %113 : vector<2x64xf32> to vector<2x64xbf16>
    %cst_35 = arith.constant dense<0.000000e+00> : vector<2x256xf32>
    %124 = tpu.matmul %123, %0, %cst_35 {dimension_numbers = #tpu.dot_dimension_numbers<[1], [0], [0], [1], [0, 0, 1, 1], [], []>} : vector<2x64xbf16>, vector<64x256xbf16>, vector<2x256xf32> -> vector<2x256xf32>
    %125 = arith.index_cast %c3_i32 : i32 to index
    %c0_36 = arith.constant 0 : index
    %c0_37 = arith.constant 0 : index
    %126 = vector.load %arg1[%125, %c0_36, %c0_37] : memref<8x2x256xf32, #tpu.memory_space<vmem>>, vector<1x2x256xf32>
    %127 = vector.shape_cast %126 : vector<1x2x256xf32> to vector<2x256xf32>
    %128 = arith.addf %127, %124 : vector<2x256xf32>
    %129 = vector.extract_strided_slice %128 {offsets = [0, 0], sizes = [2, 64], strides = [1, 1]} : vector<2x256xf32> to vector<2x64xf32>
    %130 = arith.negf %129 : vector<2x64xf32>
    %131 = math.exp %130 : vector<2x64xf32>
    %cst_38 = arith.constant 1.000000e+00 : f32
    %132 = vector.broadcast %cst_38 : f32 to vector<2x64xf32>
    %133 = arith.addf %132, %131 : vector<2x64xf32>
    %134 = arith.divf %132, %133 : vector<2x64xf32>
    %135 = vector.extract_strided_slice %128 {offsets = [0, 64], sizes = [2, 64], strides = [1, 1]} : vector<2x256xf32> to vector<2x64xf32>
    %136 = arith.negf %135 : vector<2x64xf32>
    %137 = math.exp %136 : vector<2x64xf32>
    %cst_39 = arith.constant 1.000000e+00 : f32
    %138 = vector.broadcast %cst_39 : f32 to vector<2x64xf32>
    %139 = arith.addf %138, %137 : vector<2x64xf32>
    %140 = arith.divf %138, %139 : vector<2x64xf32>
    %141 = vector.extract_strided_slice %128 {offsets = [0, 128], sizes = [2, 64], strides = [1, 1]} : vector<2x256xf32> to vector<2x64xf32>
    %142 = math.tanh %141 : vector<2x64xf32>
    %143 = vector.extract_strided_slice %128 {offsets = [0, 192], sizes = [2, 64], strides = [1, 1]} : vector<2x256xf32> to vector<2x64xf32>
    %144 = arith.negf %143 : vector<2x64xf32>
    %145 = math.exp %144 : vector<2x64xf32>
    %cst_40 = arith.constant 1.000000e+00 : f32
    %146 = vector.broadcast %cst_40 : f32 to vector<2x64xf32>
    %147 = arith.addf %146, %145 : vector<2x64xf32>
    %148 = arith.divf %146, %147 : vector<2x64xf32>
    %149 = arith.mulf %140, %111 : vector<2x64xf32>
    %150 = arith.mulf %134, %142 : vector<2x64xf32>
    %151 = arith.addf %149, %150 : vector<2x64xf32>
    %152 = math.tanh %151 : vector<2x64xf32>
    %153 = arith.mulf %148, %152 : vector<2x64xf32>
    %154 = vector.extract_strided_slice %153 {offsets = [0, 0], sizes = [2, 32], strides = [1, 1]} : vector<2x64xf32> to vector<2x32xf32>
    %155 = vector.shape_cast %154 : vector<2x32xf32> to vector<1x2x32xf32>
    %156 = arith.index_cast %c3_i32 : i32 to index
    %c0_41 = arith.constant 0 : index
    %c0_42 = arith.constant 0 : index
    %157 = vector.load %arg5[%156, %c0_41, %c0_42] : memref<8x2x64xf32, #tpu.memory_space<vmem>>, vector<1x2x32xf32>
    tpu.vector_store %arg5[%156, %c0_41, %c0_42], %155 {strides = array<i32>} : memref<8x2x64xf32, #tpu.memory_space<vmem>>, vector<1x2x32xf32>,
    %158 = vector.extract_strided_slice %153 {offsets = [0, 32], sizes = [2, 32], strides = [1, 1]} : vector<2x64xf32> to vector<2x32xf32>
    %159 = vector.shape_cast %158 : vector<2x32xf32> to vector<1x2x32xf32>
    %c7_i32_43 = arith.constant 7 : i32
    %160 = arith.subi %c7_i32_43, %c3_i32 : i32
    %161 = arith.index_cast %160 : i32 to index
    %c0_44 = arith.constant 0 : index
    %c32_45 = arith.constant 32 : index
    %162 = vector.load %arg5[%161, %c0_44, %c32_45] : memref<8x2x64xf32, #tpu.memory_space<vmem>>, vector<1x2x32xf32>
    tpu.vector_store %arg5[%161, %c0_44, %c32_45], %159 {strides = array<i32>} : memref<8x2x64xf32, #tpu.memory_space<vmem>>, vector<1x2x32xf32>,
    %c4_i32 = arith.constant 4 : i32
    %163 = arith.truncf %153 : vector<2x64xf32> to vector<2x64xbf16>
    %cst_46 = arith.constant dense<0.000000e+00> : vector<2x256xf32>
    %164 = tpu.matmul %163, %0, %cst_46 {dimension_numbers = #tpu.dot_dimension_numbers<[1], [0], [0], [1], [0, 0, 1, 1], [], []>} : vector<2x64xbf16>, vector<64x256xbf16>, vector<2x256xf32> -> vector<2x256xf32>
    %165 = arith.index_cast %c4_i32 : i32 to index
    %c0_47 = arith.constant 0 : index
    %c0_48 = arith.constant 0 : index
    %166 = vector.load %arg1[%165, %c0_47, %c0_48] : memref<8x2x256xf32, #tpu.memory_space<vmem>>, vector<1x2x256xf32>
    %167 = vector.shape_cast %166 : vector<1x2x256xf32> to vector<2x256xf32>
    %168 = arith.addf %167, %164 : vector<2x256xf32>
    %169 = vector.extract_strided_slice %168 {offsets = [0, 0], sizes = [2, 64], strides = [1, 1]} : vector<2x256xf32> to vector<2x64xf32>
    %170 = arith.negf %169 : vector<2x64xf32>
    %171 = math.exp %170 : vector<2x64xf32>
    %cst_49 = arith.constant 1.000000e+00 : f32
    %172 = vector.broadcast %cst_49 : f32 to vector<2x64xf32>
    %173 = arith.addf %172, %171 : vector<2x64xf32>
    %174 = arith.divf %172, %173 : vector<2x64xf32>
    %175 = vector.extract_strided_slice %168 {offsets = [0, 64], sizes = [2, 64], strides = [1, 1]} : vector<2x256xf32> to vector<2x64xf32>
    %176 = arith.negf %175 : vector<2x64xf32>
    %177 = math.exp %176 : vector<2x64xf32>
    %cst_50 = arith.constant 1.000000e+00 : f32
    %178 = vector.broadcast %cst_50 : f32 to vector<2x64xf32>
    %179 = arith.addf %178, %177 : vector<2x64xf32>
    %180 = arith.divf %178, %179 : vector<2x64xf32>
    %181 = vector.extract_strided_slice %168 {offsets = [0, 128], sizes = [2, 64], strides = [1, 1]} : vector<2x256xf32> to vector<2x64xf32>
    %182 = math.tanh %181 : vector<2x64xf32>
    %183 = vector.extract_strided_slice %168 {offsets = [0, 192], sizes = [2, 64], strides = [1, 1]} : vector<2x256xf32> to vector<2x64xf32>
    %184 = arith.negf %183 : vector<2x64xf32>
    %185 = math.exp %184 : vector<2x64xf32>
    %cst_51 = arith.constant 1.000000e+00 : f32
    %186 = vector.broadcast %cst_51 : f32 to vector<2x64xf32>
    %187 = arith.addf %186, %185 : vector<2x64xf32>
    %188 = arith.divf %186, %187 : vector<2x64xf32>
    %189 = arith.mulf %180, %151 : vector<2x64xf32>
    %190 = arith.mulf %174, %182 : vector<2x64xf32>
    %191 = arith.addf %189, %190 : vector<2x64xf32>
    %192 = math.tanh %191 : vector<2x64xf32>
    %193 = arith.mulf %188, %192 : vector<2x64xf32>
    %194 = vector.extract_strided_slice %193 {offsets = [0, 0], sizes = [2, 32], strides = [1, 1]} : vector<2x64xf32> to vector<2x32xf32>
    %195 = vector.shape_cast %194 : vector<2x32xf32> to vector<1x2x32xf32>
    %196 = arith.index_cast %c4_i32 : i32 to index
    %c0_52 = arith.constant 0 : index
    %c0_53 = arith.constant 0 : index
    %197 = vector.load %arg5[%196, %c0_52, %c0_53] : memref<8x2x64xf32, #tpu.memory_space<vmem>>, vector<1x2x32xf32>
    tpu.vector_store %arg5[%196, %c0_52, %c0_53], %195 {strides = array<i32>} : memref<8x2x64xf32, #tpu.memory_space<vmem>>, vector<1x2x32xf32>,
    %198 = vector.extract_strided_slice %193 {offsets = [0, 32], sizes = [2, 32], strides = [1, 1]} : vector<2x64xf32> to vector<2x32xf32>
    %199 = vector.shape_cast %198 : vector<2x32xf32> to vector<1x2x32xf32>
    %c7_i32_54 = arith.constant 7 : i32
    %200 = arith.subi %c7_i32_54, %c4_i32 : i32
    %201 = arith.index_cast %200 : i32 to index
    %c0_55 = arith.constant 0 : index
    %c32_56 = arith.constant 32 : index
    %202 = vector.load %arg5[%201, %c0_55, %c32_56] : memref<8x2x64xf32, #tpu.memory_space<vmem>>, vector<1x2x32xf32>
    tpu.vector_store %arg5[%201, %c0_55, %c32_56], %199 {strides = array<i32>} : memref<8x2x64xf32, #tpu.memory_space<vmem>>, vector<1x2x32xf32>,
    %c5_i32 = arith.constant 5 : i32
    %203 = arith.truncf %193 : vector<2x64xf32> to vector<2x64xbf16>
    %cst_57 = arith.constant dense<0.000000e+00> : vector<2x256xf32>
    %204 = tpu.matmul %203, %0, %cst_57 {dimension_numbers = #tpu.dot_dimension_numbers<[1], [0], [0], [1], [0, 0, 1, 1], [], []>} : vector<2x64xbf16>, vector<64x256xbf16>, vector<2x256xf32> -> vector<2x256xf32>
    %205 = arith.index_cast %c5_i32 : i32 to index
    %c0_58 = arith.constant 0 : index
    %c0_59 = arith.constant 0 : index
    %206 = vector.load %arg1[%205, %c0_58, %c0_59] : memref<8x2x256xf32, #tpu.memory_space<vmem>>, vector<1x2x256xf32>
    %207 = vector.shape_cast %206 : vector<1x2x256xf32> to vector<2x256xf32>
    %208 = arith.addf %207, %204 : vector<2x256xf32>
    %209 = vector.extract_strided_slice %208 {offsets = [0, 0], sizes = [2, 64], strides = [1, 1]} : vector<2x256xf32> to vector<2x64xf32>
    %210 = arith.negf %209 : vector<2x64xf32>
    %211 = math.exp %210 : vector<2x64xf32>
    %cst_60 = arith.constant 1.000000e+00 : f32
    %212 = vector.broadcast %cst_60 : f32 to vector<2x64xf32>
    %213 = arith.addf %212, %211 : vector<2x64xf32>
    %214 = arith.divf %212, %213 : vector<2x64xf32>
    %215 = vector.extract_strided_slice %208 {offsets = [0, 64], sizes = [2, 64], strides = [1, 1]} : vector<2x256xf32> to vector<2x64xf32>
    %216 = arith.negf %215 : vector<2x64xf32>
    %217 = math.exp %216 : vector<2x64xf32>
    %cst_61 = arith.constant 1.000000e+00 : f32
    %218 = vector.broadcast %cst_61 : f32 to vector<2x64xf32>
    %219 = arith.addf %218, %217 : vector<2x64xf32>
    %220 = arith.divf %218, %219 : vector<2x64xf32>
    %221 = vector.extract_strided_slice %208 {offsets = [0, 128], sizes = [2, 64], strides = [1, 1]} : vector<2x256xf32> to vector<2x64xf32>
    %222 = math.tanh %221 : vector<2x64xf32>
    %223 = vector.extract_strided_slice %208 {offsets = [0, 192], sizes = [2, 64], strides = [1, 1]} : vector<2x256xf32> to vector<2x64xf32>
    %224 = arith.negf %223 : vector<2x64xf32>
    %225 = math.exp %224 : vector<2x64xf32>
    %cst_62 = arith.constant 1.000000e+00 : f32
    %226 = vector.broadcast %cst_62 : f32 to vector<2x64xf32>
    %227 = arith.addf %226, %225 : vector<2x64xf32>
    %228 = arith.divf %226, %227 : vector<2x64xf32>
    %229 = arith.mulf %220, %191 : vector<2x64xf32>
    %230 = arith.mulf %214, %222 : vector<2x64xf32>
    %231 = arith.addf %229, %230 : vector<2x64xf32>
    %232 = math.tanh %231 : vector<2x64xf32>
    %233 = arith.mulf %228, %232 : vector<2x64xf32>
    %234 = vector.extract_strided_slice %233 {offsets = [0, 0], sizes = [2, 32], strides = [1, 1]} : vector<2x64xf32> to vector<2x32xf32>
    %235 = vector.shape_cast %234 : vector<2x32xf32> to vector<1x2x32xf32>
    %236 = arith.index_cast %c5_i32 : i32 to index
    %c0_63 = arith.constant 0 : index
    %c0_64 = arith.constant 0 : index
    %237 = vector.load %arg5[%236, %c0_63, %c0_64] : memref<8x2x64xf32, #tpu.memory_space<vmem>>, vector<1x2x32xf32>
    tpu.vector_store %arg5[%236, %c0_63, %c0_64], %235 {strides = array<i32>} : memref<8x2x64xf32, #tpu.memory_space<vmem>>, vector<1x2x32xf32>,
    %238 = vector.extract_strided_slice %233 {offsets = [0, 32], sizes = [2, 32], strides = [1, 1]} : vector<2x64xf32> to vector<2x32xf32>
    %239 = vector.shape_cast %238 : vector<2x32xf32> to vector<1x2x32xf32>
    %c7_i32_65 = arith.constant 7 : i32
    %240 = arith.subi %c7_i32_65, %c5_i32 : i32
    %241 = arith.index_cast %240 : i32 to index
    %c0_66 = arith.constant 0 : index
    %c32_67 = arith.constant 32 : index
    %242 = vector.load %arg5[%241, %c0_66, %c32_67] : memref<8x2x64xf32, #tpu.memory_space<vmem>>, vector<1x2x32xf32>
    tpu.vector_store %arg5[%241, %c0_66, %c32_67], %239 {strides = array<i32>} : memref<8x2x64xf32, #tpu.memory_space<vmem>>, vector<1x2x32xf32>,
    %c6_i32 = arith.constant 6 : i32
    %243 = arith.truncf %233 : vector<2x64xf32> to vector<2x64xbf16>
    %cst_68 = arith.constant dense<0.000000e+00> : vector<2x256xf32>
    %244 = tpu.matmul %243, %0, %cst_68 {dimension_numbers = #tpu.dot_dimension_numbers<[1], [0], [0], [1], [0, 0, 1, 1], [], []>} : vector<2x64xbf16>, vector<64x256xbf16>, vector<2x256xf32> -> vector<2x256xf32>
    %245 = arith.index_cast %c6_i32 : i32 to index
    %c0_69 = arith.constant 0 : index
    %c0_70 = arith.constant 0 : index
    %246 = vector.load %arg1[%245, %c0_69, %c0_70] : memref<8x2x256xf32, #tpu.memory_space<vmem>>, vector<1x2x256xf32>
    %247 = vector.shape_cast %246 : vector<1x2x256xf32> to vector<2x256xf32>
    %248 = arith.addf %247, %244 : vector<2x256xf32>
    %249 = vector.extract_strided_slice %248 {offsets = [0, 0], sizes = [2, 64], strides = [1, 1]} : vector<2x256xf32> to vector<2x64xf32>
    %250 = arith.negf %249 : vector<2x64xf32>
    %251 = math.exp %250 : vector<2x64xf32>
    %cst_71 = arith.constant 1.000000e+00 : f32
    %252 = vector.broadcast %cst_71 : f32 to vector<2x64xf32>
    %253 = arith.addf %252, %251 : vector<2x64xf32>
    %254 = arith.divf %252, %253 : vector<2x64xf32>
    %255 = vector.extract_strided_slice %248 {offsets = [0, 64], sizes = [2, 64], strides = [1, 1]} : vector<2x256xf32> to vector<2x64xf32>
    %256 = arith.negf %255 : vector<2x64xf32>
    %257 = math.exp %256 : vector<2x64xf32>
    %cst_72 = arith.constant 1.000000e+00 : f32
    %258 = vector.broadcast %cst_72 : f32 to vector<2x64xf32>
    %259 = arith.addf %258, %257 : vector<2x64xf32>
    %260 = arith.divf %258, %259 : vector<2x64xf32>
    %261 = vector.extract_strided_slice %248 {offsets = [0, 128], sizes = [2, 64], strides = [1, 1]} : vector<2x256xf32> to vector<2x64xf32>
    %262 = math.tanh %261 : vector<2x64xf32>
    %263 = vector.extract_strided_slice %248 {offsets = [0, 192], sizes = [2, 64], strides = [1, 1]} : vector<2x256xf32> to vector<2x64xf32>
    %264 = arith.negf %263 : vector<2x64xf32>
    %265 = math.exp %264 : vector<2x64xf32>
    %cst_73 = arith.constant 1.000000e+00 : f32
    %266 = vector.broadcast %cst_73 : f32 to vector<2x64xf32>
    %267 = arith.addf %266, %265 : vector<2x64xf32>
    %268 = arith.divf %266, %267 : vector<2x64xf32>
    %269 = arith.mulf %260, %231 : vector<2x64xf32>
    %270 = arith.mulf %254, %262 : vector<2x64xf32>
    %271 = arith.addf %269, %270 : vector<2x64xf32>
    %272 = math.tanh %271 : vector<2x64xf32>
    %273 = arith.mulf %268, %272 : vector<2x64xf32>
    %274 = vector.extract_strided_slice %273 {offsets = [0, 0], sizes = [2, 32], strides = [1, 1]} : vector<2x64xf32> to vector<2x32xf32>
    %275 = vector.shape_cast %274 : vector<2x32xf32> to vector<1x2x32xf32>
    %276 = arith.index_cast %c6_i32 : i32 to index
    %c0_74 = arith.constant 0 : index
    %c0_75 = arith.constant 0 : index
    %277 = vector.load %arg5[%276, %c0_74, %c0_75] : memref<8x2x64xf32, #tpu.memory_space<vmem>>, vector<1x2x32xf32>
    tpu.vector_store %arg5[%276, %c0_74, %c0_75], %275 {strides = array<i32>} : memref<8x2x64xf32, #tpu.memory_space<vmem>>, vector<1x2x32xf32>,
    %278 = vector.extract_strided_slice %273 {offsets = [0, 32], sizes = [2, 32], strides = [1, 1]} : vector<2x64xf32> to vector<2x32xf32>
    %279 = vector.shape_cast %278 : vector<2x32xf32> to vector<1x2x32xf32>
    %c7_i32_76 = arith.constant 7 : i32
    %280 = arith.subi %c7_i32_76, %c6_i32 : i32
    %281 = arith.index_cast %280 : i32 to index
    %c0_77 = arith.constant 0 : index
    %c32_78 = arith.constant 32 : index
    %282 = vector.load %arg5[%281, %c0_77, %c32_78] : memref<8x2x64xf32, #tpu.memory_space<vmem>>, vector<1x2x32xf32>
    tpu.vector_store %arg5[%281, %c0_77, %c32_78], %279 {strides = array<i32>} : memref<8x2x64xf32, #tpu.memory_space<vmem>>, vector<1x2x32xf32>,
    %c7_i32_79 = arith.constant 7 : i32
    %283 = arith.truncf %273 : vector<2x64xf32> to vector<2x64xbf16>
    %cst_80 = arith.constant dense<0.000000e+00> : vector<2x256xf32>
    %284 = tpu.matmul %283, %0, %cst_80 {dimension_numbers = #tpu.dot_dimension_numbers<[1], [0], [0], [1], [0, 0, 1, 1], [], []>} : vector<2x64xbf16>, vector<64x256xbf16>, vector<2x256xf32> -> vector<2x256xf32>
    %285 = arith.index_cast %c7_i32_79 : i32 to index
    %c0_81 = arith.constant 0 : index
    %c0_82 = arith.constant 0 : index
    %286 = vector.load %arg1[%285, %c0_81, %c0_82] : memref<8x2x256xf32, #tpu.memory_space<vmem>>, vector<1x2x256xf32>
    %287 = vector.shape_cast %286 : vector<1x2x256xf32> to vector<2x256xf32>
    %288 = arith.addf %287, %284 : vector<2x256xf32>
    %289 = vector.extract_strided_slice %288 {offsets = [0, 0], sizes = [2, 64], strides = [1, 1]} : vector<2x256xf32> to vector<2x64xf32>
    %290 = arith.negf %289 : vector<2x64xf32>
    %291 = math.exp %290 : vector<2x64xf32>
    %cst_83 = arith.constant 1.000000e+00 : f32
    %292 = vector.broadcast %cst_83 : f32 to vector<2x64xf32>
    %293 = arith.addf %292, %291 : vector<2x64xf32>
    %294 = arith.divf %292, %293 : vector<2x64xf32>
    %295 = vector.extract_strided_slice %288 {offsets = [0, 64], sizes = [2, 64], strides = [1, 1]} : vector<2x256xf32> to vector<2x64xf32>
    %296 = arith.negf %295 : vector<2x64xf32>
    %297 = math.exp %296 : vector<2x64xf32>
    %cst_84 = arith.constant 1.000000e+00 : f32
    %298 = vector.broadcast %cst_84 : f32 to vector<2x64xf32>
    %299 = arith.addf %298, %297 : vector<2x64xf32>
    %300 = arith.divf %298, %299 : vector<2x64xf32>
    %301 = vector.extract_strided_slice %288 {offsets = [0, 128], sizes = [2, 64], strides = [1, 1]} : vector<2x256xf32> to vector<2x64xf32>
    %302 = math.tanh %301 : vector<2x64xf32>
    %303 = vector.extract_strided_slice %288 {offsets = [0, 192], sizes = [2, 64], strides = [1, 1]} : vector<2x256xf32> to vector<2x64xf32>
    %304 = arith.negf %303 : vector<2x64xf32>
    %305 = math.exp %304 : vector<2x64xf32>
    %cst_85 = arith.constant 1.000000e+00 : f32
    %306 = vector.broadcast %cst_85 : f32 to vector<2x64xf32>
    %307 = arith.addf %306, %305 : vector<2x64xf32>
    %308 = arith.divf %306, %307 : vector<2x64xf32>
    %309 = arith.mulf %300, %271 : vector<2x64xf32>
    %310 = arith.mulf %294, %302 : vector<2x64xf32>
    %311 = arith.addf %309, %310 : vector<2x64xf32>
    %312 = math.tanh %311 : vector<2x64xf32>
    %313 = arith.mulf %308, %312 : vector<2x64xf32>
    %314 = vector.extract_strided_slice %313 {offsets = [0, 0], sizes = [2, 32], strides = [1, 1]} : vector<2x64xf32> to vector<2x32xf32>
    %315 = vector.shape_cast %314 : vector<2x32xf32> to vector<1x2x32xf32>
    %316 = arith.index_cast %c7_i32_79 : i32 to index
    %c0_86 = arith.constant 0 : index
    %c0_87 = arith.constant 0 : index
    %317 = vector.load %arg5[%316, %c0_86, %c0_87] : memref<8x2x64xf32, #tpu.memory_space<vmem>>, vector<1x2x32xf32>
    tpu.vector_store %arg5[%316, %c0_86, %c0_87], %315 {strides = array<i32>} : memref<8x2x64xf32, #tpu.memory_space<vmem>>, vector<1x2x32xf32>,
    %318 = vector.extract_strided_slice %313 {offsets = [0, 32], sizes = [2, 32], strides = [1, 1]} : vector<2x64xf32> to vector<2x32xf32>
    %319 = vector.shape_cast %318 : vector<2x32xf32> to vector<1x2x32xf32>
    %c7_i32_88 = arith.constant 7 : i32
    %320 = arith.subi %c7_i32_88, %c7_i32_79 : i32
    %321 = arith.index_cast %320 : i32 to index
    %c0_89 = arith.constant 0 : index
    %c32_90 = arith.constant 32 : index
    %322 = vector.load %arg5[%321, %c0_89, %c32_90] : memref<8x2x64xf32, #tpu.memory_space<vmem>>, vector<1x2x32xf32>
    tpu.vector_store %arg5[%321, %c0_89, %c32_90], %319 {strides = array<i32>} : memref<8x2x64xf32, #tpu.memory_space<vmem>>, vector<1x2x32xf32>,
    %c8_i32 = arith.constant 8 : i32
    return
  }
  func.func @transform_0(%arg0: i32) -> (i32, i32, i32) {
    %c0_i32 = arith.constant 0 : i32
    %c0_i32_0 = arith.constant 0 : i32
    %c0_i32_1 = arith.constant 0 : i32
    %c0_i32_2 = arith.constant 0 : i32
    return %c0_i32, %c0_i32_0, %c0_i32_1 : i32, i32, i32
  }
  func.func @transform_1(%arg0: i32) -> (i32, i32) {
    %c0_i32 = arith.constant 0 : i32
    %c0_i32_0 = arith.constant 0 : i32
    %c0_i32_1 = arith.constant 0 : i32
    return %c0_i32, %c0_i32_0 : i32, i32
  }
  func.func @transform_2(%arg0: i32) -> (i32, i32) {
    %c0_i32 = arith.constant 0 : i32
    %c0_i32_0 = arith.constant 0 : i32
    %c0_i32_1 = arith.constant 0 : i32
    return %c0_i32, %c0_i32_0 : i32, i32
  }
  func.func @transform_3(%arg0: i32) -> (i32, i32) {
    %c0_i32 = arith.constant 0 : i32
    %c0_i32_0 = arith.constant 0 : i32
    %c0_i32_1 = arith.constant 0 : i32
    return %c0_i32, %c0_i32_0 : i32, i32
  }
  func.func @transform_4(%arg0: i32) -> (i32, i32, i32) {
    %c0_i32 = arith.constant 0 : i32
    %c0_i32_0 = arith.constant 0 : i32
    %c0_i32_1 = arith.constant 0 : i32
    %c0_i32_2 = arith.constant 0 : i32
    return %c0_i32, %c0_i32_0, %c0_i32_1 : i32, i32, i32
  }
}

</mosaic_0001>

<llo_original>
// kernel: lstm_baseline_forward.2
$region0: #{lstm_baseline_forward.2}
  #allocation0 [shape = 'u32[]', space=smem, size = 0x4, offset = 0x4, fixed_abs, tag = 'smem constant byte address 0x4 - core index']
  #allocation1 [shape = 'u32[144,128]{1,0:T(1,128)}', space=vmem, size = 0x12000, scoped, tag = 'internal scratch']
  %s0 = inlined_call_operand.vmem [shape: f32[8,2,256], index: 0, kind: input, shape index: {}]
  %s1 = inlined_call_operand.vmem [shape: bf16[64,256], index: 1, kind: input, shape index: {}]
  %s2 = inlined_call_operand.vmem [shape: f32[2,64], index: 2, kind: input, shape index: {}]
  %s3 = inlined_call_operand.vmem [shape: f32[2,64], index: 3, kind: input, shape index: {}]
  %s4 = inlined_call_operand.vmem [shape: f32[8,2,64], index: 4, kind: output, shape index: {}]
  %s5 = sld [smem:[#allocation0]]
  $region26: #{lstm_baseline_forward.2} parent=0
    _
  %s7 = ssub.s32 1, %s5
  %s8 = scalar_select 0, %s7, %s5
  // Predicated region
  $region2: #{lstm_baseline_forward.2} parent=0 // pred_check
    _
  $region3: #{lstm_baseline_forward.2} parent=0 // pred_check_branch
    %10 = sbr.rel (0) target = $region5
  $region4: #{lstm_baseline_forward.2} parent=0 // pred_region
    _
  $region5: #{lstm_baseline_forward.2} parent=0 // pred_fallthru
    _
  // Predicated region
  $region6: #{lstm_baseline_forward.2} parent=0 // pred_check
    _
  $region7: #{lstm_baseline_forward.2} parent=0 // pred_check_branch
    %12 = sbr.rel (0) target = $region9
  $region8: #{lstm_baseline_forward.2} parent=0 // pred_region
    _
  $region9: #{lstm_baseline_forward.2} parent=0 // pred_fallthru
    _
  // Predicated region
  $region10: #{lstm_baseline_forward.2} parent=0 // pred_check
    _
  $region11: #{lstm_baseline_forward.2} parent=0 // pred_check_branch
    %14 = sbr.rel (0) target = $region13
  $region12: #{lstm_baseline_forward.2} parent=0 // pred_region
    _
  $region13: #{lstm_baseline_forward.2} parent=0 // pred_fallthru
    _
  // Predicated region
  $region14: #{lstm_baseline_forward.2} parent=0 // pred_check
    _
  $region15: #{lstm_baseline_forward.2} parent=0 // pred_check_branch
    %16 = sbr.rel (0) target = $region17
  $region16: #{lstm_baseline_forward.2} parent=0 // pred_region
    _
  $region17: #{lstm_baseline_forward.2} parent=0 // pred_fallthru
    _
  %v18 = vld [vmem:[%s1] sm:$0xff]
  %v19 = vld [vmem:[%s1 + $0x8] sm:$0xff]
  %v20 = vld [vmem:[%s1 + $0x10] sm:$0xff]
  %v21 = vld [vmem:[%s1 + $0x18] sm:$0xff]
  %v22 = vld [vmem:[%s1 + $0x20] sm:$0xff]
  %v23 = vld [vmem:[%s1 + $0x28] sm:$0xff]
  %v24 = vld [vmem:[%s1 + $0x30] sm:$0xff]
  %v25 = vld [vmem:[%s1 + $0x38] sm:$0xff]
  %v26 = vld [vmem:[%s2] sm:$0x3]
  %v27 = vld [vmem:[%s3] sm:$0x3]
  %v28 = vpack.c.bf16 %v26, %v26
  %v37 = vunpack.c.l.b16 %v18
  %v38 = vunpack.c.h.b16 %v18
  %v39 = vunpack.c.l.b16 %v19
  %v40 = vunpack.c.h.b16 %v19
  %v41 = vunpack.c.l.b16 %v20
  %v42 = vunpack.c.h.b16 %v20
  %v43 = vunpack.c.l.b16 %v21
  %v44 = vunpack.c.h.b16 %v21
  %v45 = vunpack.c.l.b16 %v22
  %v46 = vunpack.c.h.b16 %v22
  %v47 = vunpack.c.l.b16 %v23
  %v48 = vunpack.c.h.b16 %v23
  %v49 = vunpack.c.l.b16 %v24
  %v50 = vunpack.c.h.b16 %v24
  %v51 = vunpack.c.l.b16 %v25
  %v52 = vunpack.c.h.b16 %v25
  %v53 = vpack.c.b16 %v39, %v37
  %v54 = vpack.c.b16 %v40, %v38
  %v55 = vpack.c.b16 %v43, %v41
  %v56 = vpack.c.b16 %v44, %v42
  %v57 = vpack.c.b16 %v47, %v45
  %v58 = vpack.c.b16 %v48, %v46
  %v59 = vpack.c.b16 %v51, %v49
  %v60 = vpack.c.b16 %v52, %v50
  %vm69 = vcmask 523264
  %v71 = vsel %vm69, %v28, 0
  %73 = vmatprep.subr.bf16.mxu0 0
  %74 = vmatpush1.bf16.msra.mxu0 0
  %75 = vmatprep.subr.bf16.mxu0 0
  %76 = vmatpush1.bf16.msra.mxu0 0
  %77 = vmatprep.subr.bf16.mxu0 0
  %78 = vmatpush1.bf16.msra.mxu0 0
  %79 = vmatprep.subr.bf16.mxu0 0
  %80 = vmatpush1.bf16.msra.mxu0 0
  %81 = vmatprep.subr.bf16.mxu0 %v60
  %82 = vmatpush1.bf16.msra.mxu0 %v59
  %83 = vmatprep.subr.bf16.mxu0 %v58
  %84 = vmatpush1.bf16.msra.mxu0 %v57
  %85 = vmatprep.subr.bf16.mxu0 %v56
  %86 = vmatpush1.bf16.msra.mxu0 %v55
  %87 = vmatprep.subr.bf16.mxu0 %v54
  %88 = vmatpush1.bf16.msra.mxu0 %v53
  %89 = vmatprep.subr.bf16.mxu0 0
  %90 = vmatpush2.bf16.msra.mxu0 0
  %91 = vmatprep.subr.bf16.mxu0 0
  %92 = vmatpush2.bf16.msra.mxu0 0
  %93 = vmatprep.subr.bf16.mxu0 0
  %94 = vmatpush2.bf16.msra.mxu0 0
  %95 = vmatprep.subr.bf16.mxu0 0
  %96 = vmatpush2.bf16.msra.mxu0 0
  %97 = vmatprep.subr.bf16.mxu0 0
  %98 = vmatpush2.bf16.msra.mxu0 0
  %99 = vmatprep.subr.bf16.mxu0 0
  %100 = vmatpush2.bf16.msra.mxu0 0
  %101 = vmatprep.subr.bf16.mxu0 0
  %102 = vmatpush2.bf16.msra.mxu0 0
  %103 = vmatprep.subr.bf16.mxu0 0
  %104 = vmatpush2.bf16.msra.mxu0 0
  %105 = vmatprep.mubr.bf16.mxu0 0
  %106 = vmatmul.mubr.bf16.gmra.mxu0 %v71
  %v107 = vpop.f32.mrf.mxu0
  %v108 = vadd.f32 0.0, %v107
  %v109 = vpop.f32.mrf.mxu0
  %v110 = vadd.f32 0.0, %v109
  %v111 = vpop.f32.mrf.mxu0
  %v112 = vpop.f32.mrf.mxu0
  %113 = vdwg.mxu0
  %v114 = vld [vmem:[%s0] sm:$0xf]
  %v117 = vcombine.low %v108, %v110
  %v119 = vunpack.c.l.s4 1983009808
  %v120 = vunpack.c.0.s8 %v119
  %v121 = vlaneseq
  %v122 = vshrl.u32 %v121, 7
  %v123 = vsub.s32 %v120, %v122
  %v124 = vrot.slane %v117, %v123
  %v126 = vadd.f32 %v114, %v124
  %v127 = vxor.u32 %v126, 2147483648
  %v128 = vmul.f32 %v127, 1.442695
  %v129 = vpow.pop %v128
  %v130 = vadd.f32 %v129, 1.0
  %v131 = vrcp.pop %v130
  %v132 = vmul.f32 1.0, %v131
  %v134 = vrot.slane %v126, 2
  %v136 = vtanh.pop %v134
  %137 = vrot.lane.b32.xlu0 %v126, 64
  %v138 = vpop.permute.xlu0 %137
  %v139 = vrot.slane %v138, 2
  %v141 = vxor.u32 %v139, 2147483648
  %v142 = vmul.f32 %v141, 1.442695
  %v143 = vpow.pop %v142
  %v144 = vadd.f32 %v143, 1.0
  %v145 = vrcp.pop %v144
  %v146 = vmul.f32 1.0, %v145
  %v149 = vunpack.c.l.s4 1983009808
  %v150 = vunpack.c.0.s8 %v149
  %v151 = vlaneseq
  %v152 = vshrl.u32 %v151, 7
  %v153 = vsub.s32 %v150, %v152
  %v154 = vrot.slane %v27, %v153
  %155 = vrot.lane.b32.xlu0 %v154, 64
  %v156 = vpop.permute.xlu0 %155
  %v158 = vmul.f32 %v132, %v156
  %v159 = vmul.f32 %v132, %v136
  %161 = vrot.lane.b32.xlu0 %v159, 64
  %v162 = vpop.permute.xlu0 %161
  %v164 = vadd.f32 %v158, %v162
  %v165 = vtanh.pop %v164
  %167 = vrot.lane.b32.xlu0 %v165, 64
  %v168 = vpop.permute.xlu0 %167
  %v170 = vmul.f32 %v146, %v168
  %vm171 = vcmask 254976
  %172 = vst.msk [vmem:[%s4] sm:$0x3] %vm171, %v170
  %s173 = scalar_lea.vmem %s4, 14
  %vm174 = vcmask 517376
  %175 = vst.msk [vmem:[%s173] sm:$0x3] %vm174, %v170
  %v176 = vpack.c.bf16 %v170, %v170
  %v178 = vsel %vm69, %v176, 0
  %180 = vmatprep.subr.bf16.mxu0 0
  %181 = vmatpush1.bf16.msra.mxu0 0
  %182 = vmatprep.subr.bf16.mxu0 0
  %183 = vmatpush1.bf16.msra.mxu0 0
  %184 = vmatprep.subr.bf16.mxu0 0
  %185 = vmatpush1.bf16.msra.mxu0 0
  %186 = vmatprep.subr.bf16.mxu0 0
  %187 = vmatpush1.bf16.msra.mxu0 0
  %188 = vmatprep.subr.bf16.mxu0 %v60
  %189 = vmatpush1.bf16.msra.mxu0 %v59
  %190 = vmatprep.subr.bf16.mxu0 %v58
  %191 = vmatpush1.bf16.msra.mxu0 %v57
  %192 = vmatprep.subr.bf16.mxu0 %v56
  %193 = vmatpush1.bf16.msra.mxu0 %v55
  %194 = vmatprep.subr.bf16.mxu0 %v54
  %195 = vmatpush1.bf16.msra.mxu0 %v53
  %196 = vmatprep.subr.bf16.mxu0 0
  %197 = vmatpush2.bf16.msra.mxu0 0
  %198 = vmatprep.subr.bf16.mxu0 0
  %199 = vmatpush2.bf16.msra.mxu0 0
  %200 = vmatprep.subr.bf16.mxu0 0
  %201 = vmatpush2.bf16.msra.mxu0 0
  %202 = vmatprep.subr.bf16.mxu0 0
  %203 = vmatpush2.bf16.msra.mxu0 0
  %204 = vmatprep.subr.bf16.mxu0 0
  %205 = vmatpush2.bf16.msra.mxu0 0
  %206 = vmatprep.subr.bf16.mxu0 0
  %207 = vmatpush2.bf16.msra.mxu0 0
  %208 = vmatprep.subr.bf16.mxu0 0
  %209 = vmatpush2.bf16.msra.mxu0 0
  %210 = vmatprep.subr.bf16.mxu0 0
  %211 = vmatpush2.bf16.msra.mxu0 0
  %212 = vmatprep.mubr.bf16.mxu0 0
  %213 = vmatmul.mubr.bf16.gmra.mxu0 %v178
  %v214 = vpop.f32.mrf.mxu0
  %v215 = vadd.f32 0.0, %v214
  %v216 = vpop.f32.mrf.mxu0
  %v217 = vadd.f32 0.0, %v216
  %v218 = vpop.f32.mrf.mxu0
  %v219 = vpop.f32.mrf.mxu0
  %220 = vdwg.mxu0
  %s221 = scalar_lea.vmem %s0, 4
  %v222 = vld [vmem:[%s221] sm:$0xf]
  %v225 = vcombine.low %v215, %v217
  %v227 = vunpack.c.l.s4 1983009808
  %v228 = vunpack.c.0.s8 %v227
  %v229 = vlaneseq
  %v230 = vshrl.u32 %v229, 7
  %v231 = vsub.s32 %v228, %v230
  %v232 = vrot.slane %v225, %v231
  %v234 = vadd.f32 %v222, %v232
  %v235 = vxor.u32 %v234, 2147483648
  %v236 = vmul.f32 %v235, 1.442695
  %v237 = vpow.pop %v236
  %v238 = vadd.f32 %v237, 1.0
  %v239 = vrcp.pop %v238
  %v240 = vmul.f32 1.0, %v239
  %v242 = vrot.slane %v234, 2
  %v244 = vtanh.pop %v242
  %245 = vrot.lane.b32.xlu0 %v234, 64
  %v246 = vpop.permute.xlu0 %245
  %v247 = vrot.slane %v246, 2
  %v249 = vxor.u32 %v247, 2147483648
  %v250 = vmul.f32 %v249, 1.442695
  %v251 = vpow.pop %v250
  %v252 = vadd.f32 %v251, 1.0
  %v253 = vrcp.pop %v252
  %v254 = vmul.f32 1.0, %v253
  %v255 = vmul.f32 %v240, %v164
  %v256 = vmul.f32 %v240, %v244
  %258 = vrot.lane.b32.xlu0 %v256, 64
  %v259 = vpop.permute.xlu0 %258
  %v261 = vadd.f32 %v255, %v259
  %v262 = vtanh.pop %v261
  %264 = vrot.lane.b32.xlu0 %v262, 64
  %v265 = vpop.permute.xlu0 %264
  %v267 = vmul.f32 %v254, %v265
  %s268 = scalar_lea.vmem %s4, 2
  %269 = vst.msk [vmem:[%s268] sm:$0x3] %vm171, %v267
  %s270 = scalar_lea.vmem %s4, 12
  %271 = vst.msk [vmem:[%s270] sm:$0x3] %vm174, %v267
  %v272 = vpack.c.bf16 %v267, %v267
  %v274 = vsel %vm69, %v272, 0
  %276 = vmatprep.subr.bf16.mxu0 0
  %277 = vmatpush1.bf16.msra.mxu0 0
  %278 = vmatprep.subr.bf16.mxu0 0
  %279 = vmatpush1.bf16.msra.mxu0 0
  %280 = vmatprep.subr.bf16.mxu0 0
  %281 = vmatpush1.bf16.msra.mxu0 0
  %282 = vmatprep.subr.bf16.mxu0 0
  %283 = vmatpush1.bf16.msra.mxu0 0
  %284 = vmatprep.subr.bf16.mxu0 %v60
  %285 = vmatpush1.bf16.msra.mxu0 %v59
  %286 = vmatprep.subr.bf16.mxu0 %v58
  %287 = vmatpush1.bf16.msra.mxu0 %v57
  %288 = vmatprep.subr.bf16.mxu0 %v56
  %289 = vmatpush1.bf16.msra.mxu0 %v55
  %290 = vmatprep.subr.bf16.mxu0 %v54
  %291 = vmatpush1.bf16.msra.mxu0 %v53
  %292 = vmatprep.subr.bf16.mxu0 0
  %293 = vmatpush2.bf16.msra.mxu0 0
  %294 = vmatprep.subr.bf16.mxu0 0
  %295 = vmatpush2.bf16.msra.mxu0 0
  %296 = vmatprep.subr.bf16.mxu0 0
  %297 = vmatpush2.bf16.msra.mxu0 0
  %298 = vmatprep.subr.bf16.mxu0 0
  %299 = vmatpush2.bf16.msra.mxu0 0
  %300 = vmatprep.subr.bf16.mxu0 0
  %301 = vmatpush2.bf16.msra.mxu0 0
  %302 = vmatprep.subr.bf16.mxu0 0
  %303 = vmatpush2.bf16.msra.mxu0 0
  %304 = vmatprep.subr.bf16.mxu0 0
  %305 = vmatpush2.bf16.msra.mxu0 0
  %306 = vmatprep.subr.bf16.mxu0 0
  %307 = vmatpush2.bf16.msra.mxu0 0
  %308 = vmatprep.mubr.bf16.mxu0 0
  %309 = vmatmul.mubr.bf16.gmra.mxu0 %v274
  %v310 = vpop.f32.mrf.mxu0
  %v311 = vadd.f32 0.0, %v310
  %v312 = vpop.f32.mrf.mxu0
  %v313 = vadd.f32 0.0, %v312
  %v314 = vpop.f32.mrf.mxu0
  %v315 = vpop.f32.mrf.mxu0
  %316 = vdwg.mxu0
  %s317 = scalar_lea.vmem %s0, 8
  %v318 = vld [vmem:[%s317] sm:$0xf]
  %v321 = vcombine.low %v311, %v313
  %v323 = vunpack.c.l.s4 1983009808
  %v324 = vunpack.c.0.s8 %v323
  %v325 = vlaneseq
  %v326 = vshrl.u32 %v325, 7
  %v327 = vsub.s32 %v324, %v326
  %v328 = vrot.slane %v321, %v327
  %v330 = vadd.f32 %v318, %v328
  %v331 = vxor.u32 %v330, 2147483648
  %v332 = vmul.f32 %v331, 1.442695
  %v333 = vpow.pop %v332
  %v334 = vadd.f32 %v333, 1.0
  %v335 = vrcp.pop %v334
  %v336 = vmul.f32 1.0, %v335
  %v338 = vrot.slane %v330, 2
  %v340 = vtanh.pop %v338
  %341 = vrot.lane.b32.xlu0 %v330, 64
  %v342 = vpop.permute.xlu0 %341
  %v343 = vrot.slane %v342, 2
  %v345 = vxor.u32 %v343, 2147483648
  %v346 = vmul.f32 %v345, 1.442695
  %v347 = vpow.pop %v346
  %v348 = vadd.f32 %v347, 1.0
  %v349 = vrcp.pop %v348
  %v350 = vmul.f32 1.0, %v349
  %v351 = vmul.f32 %v336, %v261
  %v352 = vmul.f32 %v336, %v340
  %354 = vrot.lane.b32.xlu0 %v352, 64
  %v355 = vpop.permute.xlu0 %354
  %v357 = vadd.f32 %v351, %v355
  %v358 = vtanh.pop %v357
  %360 = vrot.lane.b32.xlu0 %v358, 64
  %v361 = vpop.permute.xlu0 %360
  %v363 = vmul.f32 %v350, %v361
  %s364 = scalar_lea.vmem %s4, 4
  %365 = vst.msk [vmem:[%s364] sm:$0x3] %vm171, %v363
  %s366 = scalar_lea.vmem %s4, 10
  %367 = vst.msk [vmem:[%s366] sm:$0x3] %vm174, %v363
  %v368 = vpack.c.bf16 %v363, %v363
  %v370 = vsel %vm69, %v368, 0
  %372 = vmatprep.subr.bf16.mxu0 0
  %373 = vmatpush1.bf16.msra.mxu0 0
  %374 = vmatprep.subr.bf16.mxu0 0
  %375 = vmatpush1.bf16.msra.mxu0 0
  %376 = vmatprep.subr.bf16.mxu0 0
  %377 = vmatpush1.bf16.msra.mxu0 0
  %378 = vmatprep.subr.bf16.mxu0 0
  %379 = vmatpush1.bf16.msra.mxu0 0
  %380 = vmatprep.subr.bf16.mxu0 %v60
  %381 = vmatpush1.bf16.msra.mxu0 %v59
  %382 = vmatprep.subr.bf16.mxu0 %v58
  %383 = vmatpush1.bf16.msra.mxu0 %v57
  %384 = vmatprep.subr.bf16.mxu0 %v56
  %385 = vmatpush1.bf16.msra.mxu0 %v55
  %386 = vmatprep.subr.bf16.mxu0 %v54
  %387 = vmatpush1.bf16.msra.mxu0 %v53
  %388 = vmatprep.subr.bf16.mxu0 0
  %389 = vmatpush2.bf16.msra.mxu0 0
  %390 = vmatprep.subr.bf16.mxu0 0
  %391 = vmatpush2.bf16.msra.mxu0 0
  %392 = vmatprep.subr.bf16.mxu0 0
  %393 = vmatpush2.bf16.msra.mxu0 0
  %394 = vmatprep.subr.bf16.mxu0 0
  %395 = vmatpush2.bf16.msra.mxu0 0
  %396 = vmatprep.subr.bf16.mxu0 0
  %397 = vmatpush2.bf16.msra.mxu0 0
  %398 = vmatprep.subr.bf16.mxu0 0
  %399 = vmatpush2.bf16.msra.mxu0 0
  %400 = vmatprep.subr.bf16.mxu0 0
  %401 = vmatpush2.bf16.msra.mxu0 0
  %402 = vmatprep.subr.bf16.mxu0 0
  %403 = vmatpush2.bf16.msra.mxu0 0
  %404 = vmatprep.mubr.bf16.mxu0 0
  %405 = vmatmul.mubr.bf16.gmra.mxu0 %v370
  %v406 = vpop.f32.mrf.mxu0
  %v407 = vadd.f32 0.0, %v406
  %v408 = vpop.f32.mrf.mxu0
  %v409 = vadd.f32 0.0, %v408
  %v410 = vpop.f32.mrf.mxu0
  %v411 = vpop.f32.mrf.mxu0
  %412 = vdwg.mxu0
  %s413 = scalar_lea.vmem %s0, 12
  %v414 = vld [vmem:[%s413] sm:$0xf]
  %v417 = vcombine.low %v407, %v409
  %v419 = vunpack.c.l.s4 1983009808
  %v420 = vunpack.c.0.s8 %v419
  %v421 = vlaneseq
  %v422 = vshrl.u32 %v421, 7
  %v423 = vsub.s32 %v420, %v422
  %v424 = vrot.slane %v417, %v423
  %v426 = vadd.f32 %v414, %v424
  %v427 = vxor.u32 %v426, 2147483648
  %v428 = vmul.f32 %v427, 1.442695
  %v429 = vpow.pop %v428
  %v430 = vadd.f32 %v429, 1.0
  %v431 = vrcp.pop %v430
  %v432 = vmul.f32 1.0, %v431
  %v434 = vrot.slane %v426, 2
  %v436 = vtanh.pop %v434
  %437 = vrot.lane.b32.xlu0 %v426, 64
  %v438 = vpop.permute.xlu0 %437
  %v439 = vrot.slane %v438, 2
  %v441 = vxor.u32 %v439, 2147483648
  %v442 = vmul.f32 %v441, 1.442695
  %v443 = vpow.pop %v442
  %v444 = vadd.f32 %v443, 1.0
  %v445 = vrcp.pop %v444
  %v446 = vmul.f32 1.0, %v445
  %v447 = vmul.f32 %v432, %v357
  %v448 = vmul.f32 %v432, %v436
  %450 = vrot.lane.b32.xlu0 %v448, 64
  %v451 = vpop.permute.xlu0 %450
  %v453 = vadd.f32 %v447, %v451
  %v454 = vtanh.pop %v453
  %456 = vrot.lane.b32.xlu0 %v454, 64
  %v457 = vpop.permute.xlu0 %456
  %v459 = vmul.f32 %v446, %v457
  %s460 = scalar_lea.vmem %s4, 6
  %461 = vst.msk [vmem:[%s460] sm:$0x3] %vm171, %v459
  %s462 = scalar_lea.vmem %s4, 8
  %463 = vst.msk [vmem:[%s462] sm:$0x3] %vm174, %v459
  %v464 = vpack.c.bf16 %v459, %v459
  %v466 = vsel %vm69, %v464, 0
  %468 = vmatprep.subr.bf16.mxu0 0
  %469 = vmatpush1.bf16.msra.mxu0 0
  %470 = vmatprep.subr.bf16.mxu0 0
  %471 = vmatpush1.bf16.msra.mxu0 0
  %472 = vmatprep.subr.bf16.mxu0 0
  %473 = vmatpush1.bf16.msra.mxu0 0
  %474 = vmatprep.subr.bf16.mxu0 0
  %475 = vmatpush1.bf16.msra.mxu0 0
  %476 = vmatprep.subr.bf16.mxu0 %v60
  %477 = vmatpush1.bf16.msra.mxu0 %v59
  %478 = vmatprep.subr.bf16.mxu0 %v58
  %479 = vmatpush1.bf16.msra.mxu0 %v57
  %480 = vmatprep.subr.bf16.mxu0 %v56
  %481 = vmatpush1.bf16.msra.mxu0 %v55
  %482 = vmatprep.subr.bf16.mxu0 %v54
  %483 = vmatpush1.bf16.msra.mxu0 %v53
  %484 = vmatprep.subr.bf16.mxu0 0
  %485 = vmatpush2.bf16.msra.mxu0 0
  %486 = vmatprep.subr.bf16.mxu0 0
  %487 = vmatpush2.bf16.msra.mxu0 0
  %488 = vmatprep.subr.bf16.mxu0 0
  %489 = vmatpush2.bf16.msra.mxu0 0
  %490 = vmatprep.subr.bf16.mxu0 0
  %491 = vmatpush2.bf16.msra.mxu0 0
  %492 = vmatprep.subr.bf16.mxu0 0
  %493 = vmatpush2.bf16.msra.mxu0 0
  %494 = vmatprep.subr.bf16.mxu0 0
  %495 = vmatpush2.bf16.msra.mxu0 0
  %496 = vmatprep.subr.bf16.mxu0 0
  %497 = vmatpush2.bf16.msra.mxu0 0
  %498 = vmatprep.subr.bf16.mxu0 0
  %499 = vmatpush2.bf16.msra.mxu0 0
  %500 = vmatprep.mubr.bf16.mxu0 0
  %501 = vmatmul.mubr.bf16.gmra.mxu0 %v466
  %v502 = vpop.f32.mrf.mxu0
  %v503 = vadd.f32 0.0, %v502
  %v504 = vpop.f32.mrf.mxu0
  %v505 = vadd.f32 0.0, %v504
  %v506 = vpop.f32.mrf.mxu0
  %v507 = vpop.f32.mrf.mxu0
  %508 = vdwg.mxu0
  %s509 = scalar_lea.vmem %s0, 16
  %v510 = vld [vmem:[%s509] sm:$0xf]
  %v513 = vcombine.low %v503, %v505
  %v515 = vunpack.c.l.s4 1983009808
  %v516 = vunpack.c.0.s8 %v515
  %v517 = vlaneseq
  %v518 = vshrl.u32 %v517, 7
  %v519 = vsub.s32 %v516, %v518
  %v520 = vrot.slane %v513, %v519
  %v522 = vadd.f32 %v510, %v520
  %v523 = vxor.u32 %v522, 2147483648
  %v524 = vmul.f32 %v523, 1.442695
  %v525 = vpow.pop %v524
  %v526 = vadd.f32 %v525, 1.0
  %v527 = vrcp.pop %v526
  %v528 = vmul.f32 1.0, %v527
  %v530 = vrot.slane %v522, 2
  %v532 = vtanh.pop %v530
  %533 = vrot.lane.b32.xlu0 %v522, 64
  %v534 = vpop.permute.xlu0 %533
  %v535 = vrot.slane %v534, 2
  %v537 = vxor.u32 %v535, 2147483648
  %v538 = vmul.f32 %v537, 1.442695
  %v539 = vpow.pop %v538
  %v540 = vadd.f32 %v539, 1.0
  %v541 = vrcp.pop %v540
  %v542 = vmul.f32 1.0, %v541
  %v543 = vmul.f32 %v528, %v453
  %v544 = vmul.f32 %v528, %v532
  %546 = vrot.lane.b32.xlu0 %v544, 64
  %v547 = vpop.permute.xlu0 %546
  %v549 = vadd.f32 %v543, %v547
  %v550 = vtanh.pop %v549
  %552 = vrot.lane.b32.xlu0 %v550, 64
  %v553 = vpop.permute.xlu0 %552
  %v555 = vmul.f32 %v542, %v553
  %556 = vst.msk [vmem:[%s462] sm:$0x3] %vm171, %v555
  %557 = vst.msk [vmem:[%s460] sm:$0x3] %vm174, %v555
  %v558 = vpack.c.bf16 %v555, %v555
  %v560 = vsel %vm69, %v558, 0
  %562 = vmatprep.subr.bf16.mxu0 0
  %563 = vmatpush1.bf16.msra.mxu0 0
  %564 = vmatprep.subr.bf16.mxu0 0
  %565 = vmatpush1.bf16.msra.mxu0 0
  %566 = vmatprep.subr.bf16.mxu0 0
  %567 = vmatpush1.bf16.msra.mxu0 0
  %568 = vmatprep.subr.bf16.mxu0 0
  %569 = vmatpush1.bf16.msra.mxu0 0
  %570 = vmatprep.subr.bf16.mxu0 %v60
  %571 = vmatpush1.bf16.msra.mxu0 %v59
  %572 = vmatprep.subr.bf16.mxu0 %v58
  %573 = vmatpush1.bf16.msra.mxu0 %v57
  %574 = vmatprep.subr.bf16.mxu0 %v56
  %575 = vmatpush1.bf16.msra.mxu0 %v55
  %576 = vmatprep.subr.bf16.mxu0 %v54
  %577 = vmatpush1.bf16.msra.mxu0 %v53
  %578 = vmatprep.subr.bf16.mxu0 0
  %579 = vmatpush2.bf16.msra.mxu0 0
  %580 = vmatprep.subr.bf16.mxu0 0
  %581 = vmatpush2.bf16.msra.mxu0 0
  %582 = vmatprep.subr.bf16.mxu0 0
  %583 = vmatpush2.bf16.msra.mxu0 0
  %584 = vmatprep.subr.bf16.mxu0 0
  %585 = vmatpush2.bf16.msra.mxu0 0
  %586 = vmatprep.subr.bf16.mxu0 0
  %587 = vmatpush2.bf16.msra.mxu0 0
  %588 = vmatprep.subr.bf16.mxu0 0
  %589 = vmatpush2.bf16.msra.mxu0 0
  %590 = vmatprep.subr.bf16.mxu0 0
  %591 = vmatpush2.bf16.msra.mxu0 0
  %592 = vmatprep.subr.bf16.mxu0 0
  %593 = vmatpush2.bf16.msra.mxu0 0
  %594 = vmatprep.mubr.bf16.mxu0 0
  %595 = vmatmul.mubr.bf16.gmra.mxu0 %v560
  %v596 = vpop.f32.mrf.mxu0
  %v597 = vadd.f32 0.0, %v596
  %v598 = vpop.f32.mrf.mxu0
  %v599 = vadd.f32 0.0, %v598
  %v600 = vpop.f32.mrf.mxu0
  %v601 = vpop.f32.mrf.mxu0
  %602 = vdwg.mxu0
  %s603 = scalar_lea.vmem %s0, 20
  %v604 = vld [vmem:[%s603] sm:$0xf]
  %v607 = vcombine.low %v597, %v599
  %v609 = vunpack.c.l.s4 1983009808
  %v610 = vunpack.c.0.s8 %v609
  %v611 = vlaneseq
  %v612 = vshrl.u32 %v611, 7
  %v613 = vsub.s32 %v610, %v612
  %v614 = vrot.slane %v607, %v613
  %v616 = vadd.f32 %v604, %v614
  %v617 = vxor.u32 %v616, 2147483648
  %v618 = vmul.f32 %v617, 1.442695
  %v619 = vpow.pop %v618
  %v620 = vadd.f32 %v619, 1.0
  %v621 = vrcp.pop %v620
  %v622 = vmul.f32 1.0, %v621
  %v624 = vrot.slane %v616, 2
  %v626 = vtanh.pop %v624
  %627 = vrot.lane.b32.xlu0 %v616, 64
  %v628 = vpop.permute.xlu0 %627
  %v629 = vrot.slane %v628, 2
  %v631 = vxor.u32 %v629, 2147483648
  %v632 = vmul.f32 %v631, 1.442695
  %v633 = vpow.pop %v632
  %v634 = vadd.f32 %v633, 1.0
  %v635 = vrcp.pop %v634
  %v636 = vmul.f32 1.0, %v635
  %v637 = vmul.f32 %v622, %v549
  %v638 = vmul.f32 %v622, %v626
  %640 = vrot.lane.b32.xlu0 %v638, 64
  %v641 = vpop.permute.xlu0 %640
  %v643 = vadd.f32 %v637, %v641
  %v644 = vtanh.pop %v643
  %646 = vrot.lane.b32.xlu0 %v644, 64
  %v647 = vpop.permute.xlu0 %646
  %v649 = vmul.f32 %v636, %v647
  %650 = vst.msk [vmem:[%s366] sm:$0x3] %vm171, %v649
  %651 = vst.msk [vmem:[%s364] sm:$0x3] %vm174, %v649
  %v652 = vpack.c.bf16 %v649, %v649
  %v654 = vsel %vm69, %v652, 0
  %656 = vmatprep.subr.bf16.mxu0 0
  %657 = vmatpush1.bf16.msra.mxu0 0
  %658 = vmatprep.subr.bf16.mxu0 0
  %659 = vmatpush1.bf16.msra.mxu0 0
  %660 = vmatprep.subr.bf16.mxu0 0
  %661 = vmatpush1.bf16.msra.mxu0 0
  %662 = vmatprep.subr.bf16.mxu0 0
  %663 = vmatpush1.bf16.msra.mxu0 0
  %664 = vmatprep.subr.bf16.mxu0 %v60
  %665 = vmatpush1.bf16.msra.mxu0 %v59
  %666 = vmatprep.subr.bf16.mxu0 %v58
  %667 = vmatpush1.bf16.msra.mxu0 %v57
  %668 = vmatprep.subr.bf16.mxu0 %v56
  %669 = vmatpush1.bf16.msra.mxu0 %v55
  %670 = vmatprep.subr.bf16.mxu0 %v54
  %671 = vmatpush1.bf16.msra.mxu0 %v53
  %672 = vmatprep.subr.bf16.mxu0 0
  %673 = vmatpush2.bf16.msra.mxu0 0
  %674 = vmatprep.subr.bf16.mxu0 0
  %675 = vmatpush2.bf16.msra.mxu0 0
  %676 = vmatprep.subr.bf16.mxu0 0
  %677 = vmatpush2.bf16.msra.mxu0 0
  %678 = vmatprep.subr.bf16.mxu0 0
  %679 = vmatpush2.bf16.msra.mxu0 0
  %680 = vmatprep.subr.bf16.mxu0 0
  %681 = vmatpush2.bf16.msra.mxu0 0
  %682 = vmatprep.subr.bf16.mxu0 0
  %683 = vmatpush2.bf16.msra.mxu0 0
  %684 = vmatprep.subr.bf16.mxu0 0
  %685 = vmatpush2.bf16.msra.mxu0 0
  %686 = vmatprep.subr.bf16.mxu0 0
  %687 = vmatpush2.bf16.msra.mxu0 0
  %688 = vmatprep.mubr.bf16.mxu0 0
  %689 = vmatmul.mubr.bf16.gmra.mxu0 %v654
  %v690 = vpop.f32.mrf.mxu0
  %v691 = vadd.f32 0.0, %v690
  %v692 = vpop.f32.mrf.mxu0
  %v693 = vadd.f32 0.0, %v692
  %v694 = vpop.f32.mrf.mxu0
  %v695 = vpop.f32.mrf.mxu0
  %696 = vdwg.mxu0
  %s697 = scalar_lea.vmem %s0, 24
  %v698 = vld [vmem:[%s697] sm:$0xf]
  %v701 = vcombine.low %v691, %v693
  %v703 = vunpack.c.l.s4 1983009808
  %v704 = vunpack.c.0.s8 %v703
  %v705 = vlaneseq
  %v706 = vshrl.u32 %v705, 7
  %v707 = vsub.s32 %v704, %v706
  %v708 = vrot.slane %v701, %v707
  %v710 = vadd.f32 %v698, %v708
  %v711 = vxor.u32 %v710, 2147483648
  %v712 = vmul.f32 %v711, 1.442695
  %v713 = vpow.pop %v712
  %v714 = vadd.f32 %v713, 1.0
  %v715 = vrcp.pop %v714
  %v716 = vmul.f32 1.0, %v715
  %v718 = vrot.slane %v710, 2
  %v720 = vtanh.pop %v718
  %721 = vrot.lane.b32.xlu0 %v710, 64
  %v722 = vpop.permute.xlu0 %721
  %v723 = vrot.slane %v722, 2
  %v725 = vxor.u32 %v723, 2147483648
  %v726 = vmul.f32 %v725, 1.442695
  %v727 = vpow.pop %v726
  %v728 = vadd.f32 %v727, 1.0
  %v729 = vrcp.pop %v728
  %v730 = vmul.f32 1.0, %v729
  %v731 = vmul.f32 %v716, %v643
  %v732 = vmul.f32 %v716, %v720
  %734 = vrot.lane.b32.xlu0 %v732, 64
  %v735 = vpop.permute.xlu0 %734
  %v737 = vadd.f32 %v731, %v735
  %v738 = vtanh.pop %v737
  %740 = vrot.lane.b32.xlu0 %v738, 64
  %v741 = vpop.permute.xlu0 %740
  %v743 = vmul.f32 %v730, %v741
  %744 = vst.msk [vmem:[%s270] sm:$0x3] %vm171, %v743
  %745 = vst.msk [vmem:[%s268] sm:$0x3] %vm174, %v743
  %v746 = vpack.c.bf16 %v743, %v743
  %v748 = vsel %vm69, %v746, 0
  %750 = vmatprep.subr.bf16.mxu0 0
  %751 = vmatpush1.bf16.msra.mxu0 0
  %752 = vmatprep.subr.bf16.mxu0 0
  %753 = vmatpush1.bf16.msra.mxu0 0
  %754 = vmatprep.subr.bf16.mxu0 0
  %755 = vmatpush1.bf16.msra.mxu0 0
  %756 = vmatprep.subr.bf16.mxu0 0
  %757 = vmatpush1.bf16.msra.mxu0 0
  %758 = vmatprep.subr.bf16.mxu0 %v60
  %759 = vmatpush1.bf16.msra.mxu0 %v59
  %760 = vmatprep.subr.bf16.mxu0 %v58
  %761 = vmatpush1.bf16.msra.mxu0 %v57
  %762 = vmatprep.subr.bf16.mxu0 %v56
  %763 = vmatpush1.bf16.msra.mxu0 %v55
  %764 = vmatprep.subr.bf16.mxu0 %v54
  %765 = vmatpush1.bf16.msra.mxu0 %v53
  %766 = vmatprep.subr.bf16.mxu0 0
  %767 = vmatpush2.bf16.msra.mxu0 0
  %768 = vmatprep.subr.bf16.mxu0 0
  %769 = vmatpush2.bf16.msra.mxu0 0
  %770 = vmatprep.subr.bf16.mxu0 0
  %771 = vmatpush2.bf16.msra.mxu0 0
  %772 = vmatprep.subr.bf16.mxu0 0
  %773 = vmatpush2.bf16.msra.mxu0 0
  %774 = vmatprep.subr.bf16.mxu0 0
  %775 = vmatpush2.bf16.msra.mxu0 0
  %776 = vmatprep.subr.bf16.mxu0 0
  %777 = vmatpush2.bf16.msra.mxu0 0
  %778 = vmatprep.subr.bf16.mxu0 0
  %779 = vmatpush2.bf16.msra.mxu0 0
  %780 = vmatprep.subr.bf16.mxu0 0
  %781 = vmatpush2.bf16.msra.mxu0 0
  %782 = vmatprep.mubr.bf16.mxu0 0
  %783 = vmatmul.mubr.bf16.gmra.mxu0 %v748
  %v784 = vpop.f32.mrf.mxu0
  %v785 = vadd.f32 0.0, %v784
  %v786 = vpop.f32.mrf.mxu0
  %v787 = vadd.f32 0.0, %v786
  %v788 = vpop.f32.mrf.mxu0
  %v789 = vpop.f32.mrf.mxu0
  %790 = vdwg.mxu0
  %s791 = scalar_lea.vmem %s0, 28
  %v792 = vld [vmem:[%s791] sm:$0xf]
  %v795 = vcombine.low %v785, %v787
  %v797 = vunpack.c.l.s4 1983009808
  %v798 = vunpack.c.0.s8 %v797
  %v799 = vlaneseq
  %v800 = vshrl.u32 %v799, 7
  %v801 = vsub.s32 %v798, %v800
  %v802 = vrot.slane %v795, %v801
  %v804 = vadd.f32 %v792, %v802
  %v805 = vxor.u32 %v804, 2147483648
  %v806 = vmul.f32 %v805, 1.442695
  %v807 = vpow.pop %v806
  %v808 = vadd.f32 %v807, 1.0
  %v809 = vrcp.pop %v808
  %v810 = vmul.f32 1.0, %v809
  %v812 = vrot.slane %v804, 2
  %v814 = vtanh.pop %v812
  %815 = vrot.lane.b32.xlu0 %v804, 64
  %v816 = vpop.permute.xlu0 %815
  %v817 = vrot.slane %v816, 2
  %v819 = vxor.u32 %v817, 2147483648
  %v820 = vmul.f32 %v819, 1.442695
  %v821 = vpow.pop %v820
  %v822 = vadd.f32 %v821, 1.0
  %v823 = vrcp.pop %v822
  %v824 = vmul.f32 1.0, %v823
  %v825 = vmul.f32 %v810, %v737
  %v826 = vmul.f32 %v810, %v814
  %828 = vrot.lane.b32.xlu0 %v826, 64
  %v829 = vpop.permute.xlu0 %828
  %v831 = vadd.f32 %v825, %v829
  %v832 = vtanh.pop %v831
  %834 = vrot.lane.b32.xlu0 %v832, 64
  %v835 = vpop.permute.xlu0 %834
  %v837 = vmul.f32 %v824, %v835
  %838 = vst.msk [vmem:[%s173] sm:$0x3] %vm171, %v837
  %839 = vst.msk [vmem:[%s4] sm:$0x3] %vm174, %v837
  // Predicated region
  $region18: #{lstm_baseline_forward.2} parent=0 // pred_check
    _
  $region19: #{lstm_baseline_forward.2} parent=0 // pred_check_branch
    %841 = sbr.rel (0) target = $region21
  $region20: #{lstm_baseline_forward.2} parent=0 // pred_region
    _
  $region21: #{lstm_baseline_forward.2} parent=0 // pred_fallthru
    _
  // Predicated region
  $region22: #{lstm_baseline_forward.2} parent=0 // pred_check
    _
  $region23: #{lstm_baseline_forward.2} parent=0 // pred_check_branch
    %843 = sbr.rel (0) target = $region25
  $region24: #{lstm_baseline_forward.2} parent=0 // pred_region
    _
  $region25: #{lstm_baseline_forward.2} parent=0 // pred_fallthru
    _

</llo_original>
